<compile_context>
chip_gen: v5e
topology: v5e:2x2
jax: 0.10.0
libtpu: 0.0.40
codegen_flags: <defaults>
</compile_context>

<pallas_src>
import jax
import jax.numpy as jnp
from jax.experimental import pallas as pl
from jax.experimental.pallas import tpu as pltpu

LANE = 128


def _round_up(n, m):
    return (n + m - 1) // m * m


def _mlp_kernel(x_ref, w1_ref, b1_ref, w2_ref, b2_ref, o_ref):
    # Fused MLP tile, all f32 for torch-parity: Linear -> ReLU -> Linear -> ReLU.
    x = x_ref[...]                                               # (tb, attr) f32
    h = jnp.dot(x, w1_ref[...],
                preferred_element_type=jnp.float32,
                precision=jax.lax.Precision.HIGHEST)             # (tb, hid_p) MXU, f32 acc
    h = jnp.maximum(h + b1_ref[...], 0.0)
    y = jnp.dot(h, w2_ref[...],
                preferred_element_type=jnp.float32,
                precision=jax.lax.Precision.HIGHEST)             # (tb, 2) narrow result
    o_ref[...] = jnp.maximum(y + b2_ref[...], 0.0).astype(o_ref.dtype)   # narrow (tb, 2) store


def prepare_params(w1, b1, w2, b2):
    """One-time (per-model) packing of parameters, hoisted out of the forward path.

    Weights are stored as (in, out) = transpose of PyTorch's (out, in). Only the
    hidden dim (10 -> 128) is zero-padded; padding is exact through matmul +
    zero-bias + ReLU. The output feature dim (2) is left unpadded so the HBM
    writeback stays 8 B/row.
    """
    attr_count, hidden = w1.shape
    out_dim = w2.shape[1]
    hid_p = _round_up(hidden, LANE)                     # 10 -> 128
    w1_p = jnp.zeros((attr_count, hid_p), jnp.float32).at[:, :hidden].set(w1.astype(jnp.float32))
    b1_p = jnp.zeros((1, hid_p), jnp.float32).at[:, :hidden].set(b1.reshape(1, -1).astype(jnp.float32))
    w2_p = jnp.zeros((hid_p, out_dim), jnp.float32).at[:hidden, :].set(w2.astype(jnp.float32))
    b2_p = b2.reshape(1, -1).astype(jnp.float32)        # (1, 2), unpadded
    return w1_p, b1_p, w2_p, b2_p


def net_forward(x, w1_p, b1_p, w2_p, b2_p, tile_b=2048):
    """x: (B, ...) -> flattened to (B, attr_count); returns (B, 2) f32."""
    batch = x.shape[0]
    x2d = x.reshape(batch, -1)                           # x.view(x.size(0), -1)
    if x2d.dtype != jnp.float32:
        x2d = x2d.astype(jnp.float32)
    attr_count = x2d.shape[1]
    hid_p = w1_p.shape[1]
    out_dim = w2_p.shape[1]

    # Batch tile: multiple of 8, large enough to amortize per-step overhead.
    tb = min(tile_b, _round_up(batch, 8))
    # Keep >= 2 grid steps when there is enough work so the "parallel" batch axis
    # can shard across v7x's two TensorCores (neutral on v5e/v6e).
    if batch > 256 and pl.cdiv(batch, tb) < 2:
        tb = _round_up(pl.cdiv(batch, 2), 8)
    grid = (pl.cdiv(batch, tb),)                         # ragged last block handled by Pallas

    # Explicit VMEM budget: double-buffered streamed x/out + resident weights + f32 temp h.
    vmem_bytes = (
        2 * tb * attr_count * 4                          # x tile, f32, double-buffered
        + 2 * tb * out_dim * 4                           # out tile, f32, double-buffered
        + 2 * (attr_count * hid_p + hid_p + hid_p * out_dim + out_dim) * 4   # weights/biases
        + tb * hid_p * 4                                 # in-kernel f32 temporary h
    )
    vmem_limit = int(min(max(2 * vmem_bytes, 4 << 20), 32 << 20))   # <=32 MiB: safe on v7x

    return pl.pallas_call(
        _mlp_kernel,
        out_shape=jax.ShapeDtypeStruct((batch, out_dim), jnp.float32),
        grid=grid,
        in_specs=[
            pl.BlockSpec((tb, attr_count), lambda i: (i, 0)),      # streamed activation tile
            pl.BlockSpec((attr_count, hid_p), lambda i: (0, 0)),   # resident weights / biases
            pl.BlockSpec((1, hid_p), lambda i: (0, 0)),
            pl.BlockSpec((hid_p, out_dim), lambda i: (0, 0)),
            pl.BlockSpec((1, out_dim), lambda i: (0, 0)),
        ],
        out_specs=pl.BlockSpec((tb, out_dim), lambda i: (i, 0)),   # narrow (tb, 2) store
        compiler_params=pltpu.CompilerParams(
            dimension_semantics=("parallel",),   # batch-parallel; shards across TCs on v7x
            vmem_limit_bytes=vmem_limit,
        ),
    )(x2d, w1_p, b1_p, w2_p, b2_p)


def init_params(key, attr_count, hidden=10, out_dim=2):
    """Deterministic init mimicking PyTorch nn.Linear defaults (uniform +/- 1/sqrt(fan_in)).
    Weights stored as (in, out), i.e. the transpose of PyTorch's (out, in)."""
    k1, k2, k3, k4 = jax.random.split(key, 4)
    lim1 = 1.0 / jnp.sqrt(attr_count)
    lim2 = 1.0 / jnp.sqrt(hidden)
    w1 = jax.random.uniform(k1, (attr_count, hidden), jnp.float32, -lim1, lim1)
    b1 = jax.random.uniform(k2, (hidden,), jnp.float32, -lim1, lim1)
    w2 = jax.random.uniform(k3, (hidden, out_dim), jnp.float32, -lim2, lim2)
    b2 = jax.random.uniform(k4, (out_dim,), jnp.float32, -lim2, lim2)
    return w1, b1, w2, b2


def _reference(x, w1, b1, w2, b2):
    """Pure-JAX f32 reference (full-precision matmuls), matching the PyTorch Net."""
    xb = x.reshape(x.shape[0], -1).astype(jnp.float32)
    h = jnp.maximum(
        jnp.dot(xb, w1, precision=jax.lax.Precision.HIGHEST) + b1.reshape(1, -1), 0.0)
    return jnp.maximum(
        jnp.dot(h, w2, precision=jax.lax.Precision.HIGHEST) + b2.reshape(1, -1), 0.0)


if __name__ == "__main__":
    key = jax.random.PRNGKey(0)
    k_x, k_p, k_x2 = jax.random.split(key, 3)

    batch = 8
    attr_count = 16
    x = jax.random.normal(k_x, (batch, attr_count), jnp.float32)
    w1, b1, w2, b2 = init_params(k_p, attr_count)
    w1_p, b1_p, w2_p, b2_p = prepare_params(w1, b1, w2, b2)   # hoisted out of per-call path

    out = jax.block_until_ready(net_forward(x, w1_p, b1_p, w2_p, b2_p))
    ref = _reference(x, w1, b1, w2, b2)
    assert out.shape == (batch, 2)
    # Small slack for MXU vs. XLA f32 accumulation-order differences.
    assert jnp.allclose(out, ref, atol=1e-3, rtol=1e-3)

    # Second run exercising a >=2-step grid with a ragged last batch block.
    batch2 = 1000
    x2 = jax.random.normal(k_x2, (batch2, attr_count), jnp.float32)
    out2 = jax.block_until_ready(net_forward(x2, w1_p, b1_p, w2_p, b2_p))
    ref2 = _reference(x2, w1, b1, w2, b2)
    assert out2.shape == (batch2, 2)
    assert jnp.allclose(out2, ref2, atol=1e-3, rtol=1e-3)

    print("KERNEL_OK")
</pallas_src>

<mosaic_0001>
module attributes {stable_mosaic.version = 11 : i64} {
  func.func @_mlp_kernel(%arg0: i32, %arg1: memref<8x16xf32, #tpu.memory_space<vmem>>, %arg2: memref<16x128xf32, #tpu.memory_space<vmem>>, %arg3: memref<1x128xf32, #tpu.memory_space<vmem>>, %arg4: memref<128x2xf32, #tpu.memory_space<vmem>>, %arg5: memref<1x2xf32, #tpu.memory_space<vmem>>, %arg6: memref<8x2xf32, #tpu.memory_space<vmem>>) attributes {dimension_semantics = [#tpu.dimension_semantics<parallel>], iteration_bounds = array<i64: 1>, scalar_prefetch = 0 : i64, scratch_operands = 0 : i64, tpu.core_type = #tpu.core_type<tc>, window_params = [{transform_indices = @transform_0, window_bounds = array<i64: 8, 16>}, {pipeline_mode = #tpu.pipeline_mode<synchronous>, transform_indices = @transform_1, window_bounds = array<i64: 16, 128>}, {pipeline_mode = #tpu.pipeline_mode<synchronous>, transform_indices = @transform_2, window_bounds = array<i64: 1, 128>}, {pipeline_mode = #tpu.pipeline_mode<synchronous>, transform_indices = @transform_3, window_bounds = array<i64: 128, 2>}, {pipeline_mode = #tpu.pipeline_mode<synchronous>, transform_indices = @transform_4, window_bounds = array<i64: 1, 2>}, {transform_indices = @transform_5, window_bounds = array<i64: 8, 2>}]} {
    %c0 = arith.constant 0 : index
    %c0_0 = arith.constant 0 : index
    %0 = vector.load %arg1[%c0, %c0_0] : memref<8x16xf32, #tpu.memory_space<vmem>>, vector<8x16xf32>
    %c0_1 = arith.constant 0 : index
    %c0_2 = arith.constant 0 : index
    %1 = vector.load %arg2[%c0_1, %c0_2] : memref<16x128xf32, #tpu.memory_space<vmem>>, vector<16x128xf32>
    %cst = arith.constant dense<0.000000e+00> : vector<8x128xf32>
    %2 = tpu.matmul %0, %1, %cst {dimension_numbers = #tpu.dot_dimension_numbers<[1], [0], [0], [1], [0, 0, 1, 1], [], []>, precision = #tpu.contract_precision<fp32>} : vector<8x16xf32>, vector<16x128xf32>, vector<8x128xf32> -> vector<8x128xf32>
    %c0_3 = arith.constant 0 : index
    %c0_4 = arith.constant 0 : index
    %3 = vector.load %arg3[%c0_3, %c0_4] : memref<1x128xf32, #tpu.memory_space<vmem>>, vector<1x128xf32>
    %4 = vector.broadcast %3 : vector<1x128xf32> to vector<8x128xf32>
    %5 = arith.addf %2, %4 : vector<8x128xf32>
    %cst_5 = arith.constant 0.000000e+00 : f32
    %6 = vector.broadcast %cst_5 : f32 to vector<8x128xf32>
    %7 = arith.maximumf %5, %6 : vector<8x128xf32>
    %c0_6 = arith.constant 0 : index
    %c0_7 = arith.constant 0 : index
    %8 = vector.load %arg4[%c0_6, %c0_7] : memref<128x2xf32, #tpu.memory_space<vmem>>, vector<128x2xf32>
    %cst_8 = arith.constant dense<0.000000e+00> : vector<8x2xf32>
    %9 = tpu.matmul %7, %8, %cst_8 {dimension_numbers = #tpu.dot_dimension_numbers<[1], [0], [0], [1], [0, 0, 1, 1], [], []>, precision = #tpu.contract_precision<fp32>} : vector<8x128xf32>, vector<128x2xf32>, vector<8x2xf32> -> vector<8x2xf32>
    %c0_9 = arith.constant 0 : index
    %c0_10 = arith.constant 0 : index
    %10 = vector.load %arg5[%c0_9, %c0_10] : memref<1x2xf32, #tpu.memory_space<vmem>>, vector<1x2xf32>
    %11 = vector.broadcast %10 : vector<1x2xf32> to vector<8x2xf32>
    %12 = arith.addf %9, %11 : vector<8x2xf32>
    %cst_11 = arith.constant 0.000000e+00 : f32
    %13 = vector.broadcast %cst_11 : f32 to vector<8x2xf32>
    %14 = arith.maximumf %12, %13 : vector<8x2xf32>
    %c0_12 = arith.constant 0 : index
    %c0_13 = arith.constant 0 : index
    %15 = vector.load %arg6[%c0_12, %c0_13] : memref<8x2xf32, #tpu.memory_space<vmem>>, vector<8x2xf32>
    tpu.vector_store %arg6[%c0_12, %c0_13], %14 {strides = array<i32>} : memref<8x2xf32, #tpu.memory_space<vmem>>, vector<8x2xf32>,
    return
  }
  func.func @transform_0(%arg0: i32) -> (i32, i32) {
    %c0_i32 = arith.constant 0 : i32
    %c0_i32_0 = arith.constant 0 : i32
    return %arg0, %c0_i32 : i32, i32
  }
  func.func @transform_1(%arg0: i32) -> (i32, i32) {
    %c0_i32 = arith.constant 0 : i32
    %c0_i32_0 = arith.constant 0 : i32
    %c0_i32_1 = arith.constant 0 : i32
    return %c0_i32, %c0_i32_0 : i32, i32
  }
  func.func @transform_2(%arg0: i32) -> (i32, i32) {
    %c0_i32 = arith.constant 0 : i32
    %c0_i32_0 = arith.constant 0 : i32
    %c0_i32_1 = arith.constant 0 : i32
    return %c0_i32, %c0_i32_0 : i32, i32
  }
  func.func @transform_3(%arg0: i32) -> (i32, i32) {
    %c0_i32 = arith.constant 0 : i32
    %c0_i32_0 = arith.constant 0 : i32
    %c0_i32_1 = arith.constant 0 : i32
    return %c0_i32, %c0_i32_0 : i32, i32
  }
  func.func @transform_4(%arg0: i32) -> (i32, i32) {
    %c0_i32 = arith.constant 0 : i32
    %c0_i32_0 = arith.constant 0 : i32
    %c0_i32_1 = arith.constant 0 : i32
    return %c0_i32, %c0_i32_0 : i32, i32
  }
  func.func @transform_5(%arg0: i32) -> (i32, i32) {
    %c0_i32 = arith.constant 0 : i32
    %c0_i32_0 = arith.constant 0 : i32
    return %arg0, %c0_i32 : i32, i32
  }
}

</mosaic_0001>

<llo_original>
// kernel: tpu_custom_call.1
$region0: #{tpu_custom_call.1}
  #allocation0 [shape = 'u32[]', space=smem, size = 0x4, offset = 0x4, fixed_abs, tag = 'smem constant byte address 0x4 - core index']
  #allocation1 [shape = 'u32[72,128]{1,0:T(1,128)}', space=vmem, size = 0x9000, scoped, tag = 'internal scratch']
  %s0 = inlined_call_operand.vmem [shape: f32[8,16], index: 0, kind: input, shape index: {}]
  %s1 = inlined_call_operand.vmem [shape: f32[16,128], index: 1, kind: input, shape index: {}]
  %s2 = inlined_call_operand.vmem [shape: f32[1,128], index: 2, kind: input, shape index: {}]
  %s3 = inlined_call_operand.vmem [shape: f32[128,2], index: 3, kind: input, shape index: {}]
  %s4 = inlined_call_operand.vmem [shape: f32[1,2], index: 4, kind: input, shape index: {}]
  %s5 = inlined_call_operand.vmem [shape: f32[8,2], index: 5, kind: output, shape index: {}]
  %s6 = sld [smem:[#allocation0]]
  $region30: #{tpu_custom_call.1} parent=0
    _
  %s8 = ssub.s32 1, %s6
  %s9 = scalar_select 0, %s8, %s6
  // Predicated region
  $region2: #{tpu_custom_call.1} parent=0 // pred_check
    _
  $region3: #{tpu_custom_call.1} parent=0 // pred_check_branch
    %11 = sbr.rel (0) target = $region5
  $region4: #{tpu_custom_call.1} parent=0 // pred_region
    _
  $region5: #{tpu_custom_call.1} parent=0 // pred_fallthru
    _
  // Predicated region
  $region6: #{tpu_custom_call.1} parent=0 // pred_check
    _
  $region7: #{tpu_custom_call.1} parent=0 // pred_check_branch
    %13 = sbr.rel (0) target = $region9
  $region8: #{tpu_custom_call.1} parent=0 // pred_region
    _
  $region9: #{tpu_custom_call.1} parent=0 // pred_fallthru
    _
  // Predicated region
  $region10: #{tpu_custom_call.1} parent=0 // pred_check
    _
  $region11: #{tpu_custom_call.1} parent=0 // pred_check_branch
    %15 = sbr.rel (0) target = $region13
  $region12: #{tpu_custom_call.1} parent=0 // pred_region
    _
  $region13: #{tpu_custom_call.1} parent=0 // pred_fallthru
    _
  // Predicated region
  $region14: #{tpu_custom_call.1} parent=0 // pred_check
    _
  $region15: #{tpu_custom_call.1} parent=0 // pred_check_branch
    %17 = sbr.rel (0) target = $region17
  $region16: #{tpu_custom_call.1} parent=0 // pred_region
    _
  $region17: #{tpu_custom_call.1} parent=0 // pred_fallthru
    _
  // Predicated region
  $region18: #{tpu_custom_call.1} parent=0 // pred_check
    _
  $region19: #{tpu_custom_call.1} parent=0 // pred_check_branch
    %19 = sbr.rel (0) target = $region21
  $region20: #{tpu_custom_call.1} parent=0 // pred_region
    _
  $region21: #{tpu_custom_call.1} parent=0 // pred_fallthru
    _
  %v20 = vld [vmem:[%s0] sm:$0xff]
  %v21 = vld [vmem:[%s1] sm:$0xff]
  %v22 = vld [vmem:[%s1 + $0x8] sm:$0xff]
  %v23 = vld [vmem:[%s2] sm:$0x1]
  %v25 = vperm.slane %v23, 0
  %vm27 = vcmask 130048
  %v29 = vsel %vm27, %v20, 0
  %31 = vmatpush.msra.mxu0 0.0
  %32 = vmatpush.msra.mxu0 0.0
  %33 = vmatpush.msra.mxu0 0.0
  %34 = vmatpush.msra.mxu0 0.0
  %35 = vmatpush.msra.mxu0 0.0
  %36 = vmatpush.msra.mxu0 0.0
  %37 = vmatpush.msra.mxu0 0.0
  %38 = vmatpush.msra.mxu0 0.0
  %39 = vmatpush.msra.mxu0 0.0
  %40 = vmatpush.msra.mxu0 0.0
  %41 = vmatpush.msra.mxu0 0.0
  %42 = vmatpush.msra.mxu0 0.0
  %43 = vmatpush.msra.mxu0 0.0
  %44 = vmatpush.msra.mxu0 0.0
  %v45 = vand.u32 %v22, 4294901760
  %46 = vmatpush.msra.mxu0 %v45
  %v47 = vand.u32 %v21, 4294901760
  %48 = vmatpush.msra.mxu0 %v47
  %v49 = vand.u32 %v29, 4294901760
  %v50 = vsub.f32 %v29, %v49
  %v51 = vand.u32 %v50, 4294901760
  %v52 = vsub.f32 %v50, %v51
  %v53 = vand.u32 %v52, 4294901760
  %54 = vmatmul.f32.gmra.mxu0 %v53
  %v55 = vpop.f32.mrf.mxu0
  %v56 = vadd.f32 %v25, %v55
  %57 = vdwg.mxu0
  %58 = vmatpush.msra.mxu0 0.0
  %59 = vmatpush.msra.mxu0 0.0
  %60 = vmatpush.msra.mxu0 0.0
  %61 = vmatpush.msra.mxu0 0.0
  %62 = vmatpush.msra.mxu0 0.0
  %63 = vmatpush.msra.mxu0 0.0
  %64 = vmatpush.msra.mxu0 0.0
  %65 = vmatpush.msra.mxu0 0.0
  %66 = vmatpush.msra.mxu0 0.0
  %67 = vmatpush.msra.mxu0 0.0
  %68 = vmatpush.msra.mxu0 0.0
  %69 = vmatpush.msra.mxu0 0.0
  %70 = vmatpush.msra.mxu0 0.0
  %71 = vmatpush.msra.mxu0 0.0
  %v72 = vand.u32 %v22, 4294901760
  %v73 = vsub.f32 %v22, %v72
  %v74 = vand.u32 %v73, 4294901760
  %v75 = vsub.f32 %v73, %v74
  %v76 = vand.u32 %v75, 4294901760
  %77 = vmatpush.msra.mxu0 %v76
  %v78 = vand.u32 %v21, 4294901760
  %v79 = vsub.f32 %v21, %v78
  %v80 = vand.u32 %v79, 4294901760
  %v81 = vsub.f32 %v79, %v80
  %v82 = vand.u32 %v81, 4294901760
  %83 = vmatpush.msra.mxu0 %v82
  %v84 = vand.u32 %v29, 4294901760
  %85 = vmatmul.f32.gmra.mxu0 %v84
  %v86 = vpop.f32.mrf.mxu0
  %v87 = vadd.f32 %v56, %v86
  %88 = vdwg.mxu0
  %89 = vmatpush.msra.mxu0 0.0
  %90 = vmatpush.msra.mxu0 0.0
  %91 = vmatpush.msra.mxu0 0.0
  %92 = vmatpush.msra.mxu0 0.0
  %93 = vmatpush.msra.mxu0 0.0
  %94 = vmatpush.msra.mxu0 0.0
  %95 = vmatpush.msra.mxu0 0.0
  %96 = vmatpush.msra.mxu0 0.0
  %97 = vmatpush.msra.mxu0 0.0
  %98 = vmatpush.msra.mxu0 0.0
  %99 = vmatpush.msra.mxu0 0.0
  %100 = vmatpush.msra.mxu0 0.0
  %101 = vmatpush.msra.mxu0 0.0
  %102 = vmatpush.msra.mxu0 0.0
  %v103 = vand.u32 %v22, 4294901760
  %v104 = vsub.f32 %v22, %v103
  %105 = vmatpush.msra.mxu0 %v104
  %v106 = vand.u32 %v21, 4294901760
  %v107 = vsub.f32 %v21, %v106
  %108 = vmatpush.msra.mxu0 %v107
  %v109 = vand.u32 %v29, 4294901760
  %v110 = vsub.f32 %v29, %v109
  %111 = vmatmul.f32.gmra.mxu0 %v110
  %v112 = vpop.f32.mrf.mxu0
  %v113 = vadd.f32 %v87, %v112
  %114 = vdwg.mxu0
  %115 = vmatpush.msra.mxu0 0.0
  %116 = vmatpush.msra.mxu0 0.0
  %117 = vmatpush.msra.mxu0 0.0
  %118 = vmatpush.msra.mxu0 0.0
  %119 = vmatpush.msra.mxu0 0.0
  %120 = vmatpush.msra.mxu0 0.0
  %121 = vmatpush.msra.mxu0 0.0
  %122 = vmatpush.msra.mxu0 0.0
  %123 = vmatpush.msra.mxu0 0.0
  %124 = vmatpush.msra.mxu0 0.0
  %125 = vmatpush.msra.mxu0 0.0
  %126 = vmatpush.msra.mxu0 0.0
  %127 = vmatpush.msra.mxu0 0.0
  %128 = vmatpush.msra.mxu0 0.0
  %v129 = vand.u32 %v22, 4294901760
  %130 = vmatpush.msra.mxu0 %v129
  %v131 = vand.u32 %v21, 4294901760
  %132 = vmatpush.msra.mxu0 %v131
  %v133 = vand.u32 %v29, 4294901760
  %v134 = vsub.f32 %v29, %v133
  %v135 = vand.u32 %v134, 4294901760
  %136 = vmatmul.f32.gmra.mxu0 %v135
  %v137 = vpop.f32.mrf.mxu0
  %v138 = vadd.f32 %v113, %v137
  %139 = vdwg.mxu0
  %140 = vmatpush.msra.mxu0 0.0
  %141 = vmatpush.msra.mxu0 0.0
  %142 = vmatpush.msra.mxu0 0.0
  %143 = vmatpush.msra.mxu0 0.0
  %144 = vmatpush.msra.mxu0 0.0
  %145 = vmatpush.msra.mxu0 0.0
  %146 = vmatpush.msra.mxu0 0.0
  %147 = vmatpush.msra.mxu0 0.0
  %148 = vmatpush.msra.mxu0 0.0
  %149 = vmatpush.msra.mxu0 0.0
  %150 = vmatpush.msra.mxu0 0.0
  %151 = vmatpush.msra.mxu0 0.0
  %152 = vmatpush.msra.mxu0 0.0
  %153 = vmatpush.msra.mxu0 0.0
  %v154 = vand.u32 %v22, 4294901760
  %v155 = vsub.f32 %v22, %v154
  %v156 = vand.u32 %v155, 4294901760
  %157 = vmatpush.msra.mxu0 %v156
  %v158 = vand.u32 %v21, 4294901760
  %v159 = vsub.f32 %v21, %v158
  %v160 = vand.u32 %v159, 4294901760
  %161 = vmatpush.msra.mxu0 %v160
  %v162 = vand.u32 %v29, 4294901760
  %163 = vmatmul.f32.gmra.mxu0 %v162
  %v164 = vpop.f32.mrf.mxu0
  %v165 = vadd.f32 %v138, %v164
  %166 = vdwg.mxu0
  %167 = vmatpush.msra.mxu0 0.0
  %168 = vmatpush.msra.mxu0 0.0
  %169 = vmatpush.msra.mxu0 0.0
  %170 = vmatpush.msra.mxu0 0.0
  %171 = vmatpush.msra.mxu0 0.0
  %172 = vmatpush.msra.mxu0 0.0
  %173 = vmatpush.msra.mxu0 0.0
  %174 = vmatpush.msra.mxu0 0.0
  %175 = vmatpush.msra.mxu0 0.0
  %176 = vmatpush.msra.mxu0 0.0
  %177 = vmatpush.msra.mxu0 0.0
  %178 = vmatpush.msra.mxu0 0.0
  %179 = vmatpush.msra.mxu0 0.0
  %180 = vmatpush.msra.mxu0 0.0
  %v181 = vand.u32 %v22, 4294901760
  %182 = vmatpush.msra.mxu0 %v181
  %v183 = vand.u32 %v21, 4294901760
  %184 = vmatpush.msra.mxu0 %v183
  %v185 = vand.u32 %v29, 4294901760
  %186 = vmatmul.f32.gmra.mxu0 %v185
  %v187 = vpop.f32.mrf.mxu0
  %v188 = vadd.f32 %v165, %v187
  %189 = vdwg.mxu0
  %v190 = vmax.f32 %v188, 0.0
  %v191 = vld [vmem:[%s3] sm:$0xff]
  %v192 = vld [vmem:[%s3 + $0x8] sm:$0xff]
  %v193 = vld [vmem:[%s3 + $0x10] sm:$0xff]
  %v194 = vld [vmem:[%s3 + $0x18] sm:$0xff]
  %v195 = vld [vmem:[%s3 + $0x20] sm:$0xff]
  %v196 = vld [vmem:[%s3 + $0x28] sm:$0xff]
  %v197 = vld [vmem:[%s3 + $0x30] sm:$0xff]
  %v198 = vld [vmem:[%s3 + $0x38] sm:$0xff]
  %v199 = vld [vmem:[%s3 + $0x40] sm:$0xff]
  %v200 = vld [vmem:[%s3 + $0x48] sm:$0xff]
  %v201 = vld [vmem:[%s3 + $0x50] sm:$0xff]
  %v202 = vld [vmem:[%s3 + $0x58] sm:$0xff]
  %v203 = vld [vmem:[%s3 + $0x60] sm:$0xff]
  %v204 = vld [vmem:[%s3 + $0x68] sm:$0xff]
  %v205 = vld [vmem:[%s3 + $0x70] sm:$0xff]
  %v206 = vld [vmem:[%s3 + $0x78] sm:$0xff]
  %v207 = vld [vmem:[%s4] sm:$0x1]
  %v209 = vperm.slane %v207, 0
  %v211 = vand.u32 %v206, 4294901760
  %212 = vmatpush.msra.mxu0 %v211
  %v213 = vand.u32 %v205, 4294901760
  %214 = vmatpush.msra.mxu0 %v213
  %v215 = vand.u32 %v204, 4294901760
  %216 = vmatpush.msra.mxu0 %v215
  %v217 = vand.u32 %v203, 4294901760
  %218 = vmatpush.msra.mxu0 %v217
  %v219 = vand.u32 %v202, 4294901760
  %220 = vmatpush.msra.mxu0 %v219
  %v221 = vand.u32 %v201, 4294901760
  %222 = vmatpush.msra.mxu0 %v221
  %v223 = vand.u32 %v200, 4294901760
  %224 = vmatpush.msra.mxu0 %v223
  %v225 = vand.u32 %v199, 4294901760
  %226 = vmatpush.msra.mxu0 %v225
  %v227 = vand.u32 %v198, 4294901760
  %228 = vmatpush.msra.mxu0 %v227
  %v229 = vand.u32 %v197, 4294901760
  %230 = vmatpush.msra.mxu0 %v229
  %v231 = vand.u32 %v196, 4294901760
  %232 = vmatpush.msra.mxu0 %v231
  %v233 = vand.u32 %v195, 4294901760
  %234 = vmatpush.msra.mxu0 %v233
  %v235 = vand.u32 %v194, 4294901760
  %236 = vmatpush.msra.mxu0 %v235
  %v237 = vand.u32 %v193, 4294901760
  %238 = vmatpush.msra.mxu0 %v237
  %v239 = vand.u32 %v192, 4294901760
  %240 = vmatpush.msra.mxu0 %v239
  %v241 = vand.u32 %v191, 4294901760
  %242 = vmatpush.msra.mxu0 %v241
  %v243 = vand.u32 %v190, 4294901760
  %v244 = vsub.f32 %v190, %v243
  %v245 = vand.u32 %v244, 4294901760
  %v246 = vsub.f32 %v244, %v245
  %v247 = vand.u32 %v246, 4294901760
  %248 = vmatmul.f32.gmra.mxu0 %v247
  %v249 = vpop.f32.mrf.mxu0
  %v250 = vadd.f32 %v209, %v249
  %251 = vdwg.mxu0
  %v252 = vand.u32 %v206, 4294901760
  %v253 = vsub.f32 %v206, %v252
  %v254 = vand.u32 %v253, 4294901760
  %v255 = vsub.f32 %v253, %v254
  %v256 = vand.u32 %v255, 4294901760
  %257 = vmatpush.msra.mxu0 %v256
  %v258 = vand.u32 %v205, 4294901760
  %v259 = vsub.f32 %v205, %v258
  %v260 = vand.u32 %v259, 4294901760
  %v261 = vsub.f32 %v259, %v260
  %v262 = vand.u32 %v261, 4294901760
  %263 = vmatpush.msra.mxu0 %v262
  %v264 = vand.u32 %v204, 4294901760
  %v265 = vsub.f32 %v204, %v264
  %v266 = vand.u32 %v265, 4294901760
  %v267 = vsub.f32 %v265, %v266
  %v268 = vand.u32 %v267, 4294901760
  %269 = vmatpush.msra.mxu0 %v268
  %v270 = vand.u32 %v203, 4294901760
  %v271 = vsub.f32 %v203, %v270
  %v272 = vand.u32 %v271, 4294901760
  %v273 = vsub.f32 %v271, %v272
  %v274 = vand.u32 %v273, 4294901760
  %275 = vmatpush.msra.mxu0 %v274
  %v276 = vand.u32 %v202, 4294901760
  %v277 = vsub.f32 %v202, %v276
  %v278 = vand.u32 %v277, 4294901760
  %v279 = vsub.f32 %v277, %v278
  %v280 = vand.u32 %v279, 4294901760
  %281 = vmatpush.msra.mxu0 %v280
  %v282 = vand.u32 %v201, 4294901760
  %v283 = vsub.f32 %v201, %v282
  %v284 = vand.u32 %v283, 4294901760
  %v285 = vsub.f32 %v283, %v284
  %v286 = vand.u32 %v285, 4294901760
  %287 = vmatpush.msra.mxu0 %v286
  %v288 = vand.u32 %v200, 4294901760
  %v289 = vsub.f32 %v200, %v288
  %v290 = vand.u32 %v289, 4294901760
  %v291 = vsub.f32 %v289, %v290
  %v292 = vand.u32 %v291, 4294901760
  %293 = vmatpush.msra.mxu0 %v292
  %v294 = vand.u32 %v199, 4294901760
  %v295 = vsub.f32 %v199, %v294
  %v296 = vand.u32 %v295, 4294901760
  %v297 = vsub.f32 %v295, %v296
  %v298 = vand.u32 %v297, 4294901760
  %299 = vmatpush.msra.mxu0 %v298
  %v300 = vand.u32 %v198, 4294901760
  %v301 = vsub.f32 %v198, %v300
  %v302 = vand.u32 %v301, 4294901760
  %v303 = vsub.f32 %v301, %v302
  %v304 = vand.u32 %v303, 4294901760
  %305 = vmatpush.msra.mxu0 %v304
  %v306 = vand.u32 %v197, 4294901760
  %v307 = vsub.f32 %v197, %v306
  %v308 = vand.u32 %v307, 4294901760
  %v309 = vsub.f32 %v307, %v308
  %v310 = vand.u32 %v309, 4294901760
  %311 = vmatpush.msra.mxu0 %v310
  %v312 = vand.u32 %v196, 4294901760
  %v313 = vsub.f32 %v196, %v312
  %v314 = vand.u32 %v313, 4294901760
  %v315 = vsub.f32 %v313, %v314
  %v316 = vand.u32 %v315, 4294901760
  %317 = vmatpush.msra.mxu0 %v316
  %v318 = vand.u32 %v195, 4294901760
  %v319 = vsub.f32 %v195, %v318
  %v320 = vand.u32 %v319, 4294901760
  %v321 = vsub.f32 %v319, %v320
  %v322 = vand.u32 %v321, 4294901760
  %323 = vmatpush.msra.mxu0 %v322
  %v324 = vand.u32 %v194, 4294901760
  %v325 = vsub.f32 %v194, %v324
  %v326 = vand.u32 %v325, 4294901760
  %v327 = vsub.f32 %v325, %v326
  %v328 = vand.u32 %v327, 4294901760
  %329 = vmatpush.msra.mxu0 %v328
  %v330 = vand.u32 %v193, 4294901760
  %v331 = vsub.f32 %v193, %v330
  %v332 = vand.u32 %v331, 4294901760
  %v333 = vsub.f32 %v331, %v332
  %v334 = vand.u32 %v333, 4294901760
  %335 = vmatpush.msra.mxu0 %v334
  %v336 = vand.u32 %v192, 4294901760
  %v337 = vsub.f32 %v192, %v336
  %v338 = vand.u32 %v337, 4294901760
  %v339 = vsub.f32 %v337, %v338
  %v340 = vand.u32 %v339, 4294901760
  %341 = vmatpush.msra.mxu0 %v340
  %v342 = vand.u32 %v191, 4294901760
  %v343 = vsub.f32 %v191, %v342
  %v344 = vand.u32 %v343, 4294901760
  %v345 = vsub.f32 %v343, %v344
  %v346 = vand.u32 %v345, 4294901760
  %347 = vmatpush.msra.mxu0 %v346
  %v348 = vand.u32 %v190, 4294901760
  %349 = vmatmul.f32.gmra.mxu0 %v348
  %v350 = vpop.f32.mrf.mxu0
  %v351 = vadd.f32 %v250, %v350
  %352 = vdwg.mxu0
  %v353 = vand.u32 %v206, 4294901760
  %v354 = vsub.f32 %v206, %v353
  %355 = vmatpush.msra.mxu0 %v354
  %v356 = vand.u32 %v205, 4294901760
  %v357 = vsub.f32 %v205, %v356
  %358 = vmatpush.msra.mxu0 %v357
  %v359 = vand.u32 %v204, 4294901760
  %v360 = vsub.f32 %v204, %v359
  %361 = vmatpush.msra.mxu0 %v360
  %v362 = vand.u32 %v203, 4294901760
  %v363 = vsub.f32 %v203, %v362
  %364 = vmatpush.msra.mxu0 %v363
  %v365 = vand.u32 %v202, 4294901760
  %v366 = vsub.f32 %v202, %v365
  %367 = vmatpush.msra.mxu0 %v366
  %v368 = vand.u32 %v201, 4294901760
  %v369 = vsub.f32 %v201, %v368
  %370 = vmatpush.msra.mxu0 %v369
  %v371 = vand.u32 %v200, 4294901760
  %v372 = vsub.f32 %v200, %v371
  %373 = vmatpush.msra.mxu0 %v372
  %v374 = vand.u32 %v199, 4294901760
  %v375 = vsub.f32 %v199, %v374
  %376 = vmatpush.msra.mxu0 %v375
  %v377 = vand.u32 %v198, 4294901760
  %v378 = vsub.f32 %v198, %v377
  %379 = vmatpush.msra.mxu0 %v378
  %v380 = vand.u32 %v197, 4294901760
  %v381 = vsub.f32 %v197, %v380
  %382 = vmatpush.msra.mxu0 %v381
  %v383 = vand.u32 %v196, 4294901760
  %v384 = vsub.f32 %v196, %v383
  %385 = vmatpush.msra.mxu0 %v384
  %v386 = vand.u32 %v195, 4294901760
  %v387 = vsub.f32 %v195, %v386
  %388 = vmatpush.msra.mxu0 %v387
  %v389 = vand.u32 %v194, 4294901760
  %v390 = vsub.f32 %v194, %v389
  %391 = vmatpush.msra.mxu0 %v390
  %v392 = vand.u32 %v193, 4294901760
  %v393 = vsub.f32 %v193, %v392
  %394 = vmatpush.msra.mxu0 %v393
  %v395 = vand.u32 %v192, 4294901760
  %v396 = vsub.f32 %v192, %v395
  %397 = vmatpush.msra.mxu0 %v396
  %v398 = vand.u32 %v191, 4294901760
  %v399 = vsub.f32 %v191, %v398
  %400 = vmatpush.msra.mxu0 %v399
  %v401 = vand.u32 %v190, 4294901760
  %v402 = vsub.f32 %v190, %v401
  %403 = vmatmul.f32.gmra.mxu0 %v402
  %v404 = vpop.f32.mrf.mxu0
  %v405 = vadd.f32 %v351, %v404
  %406 = vdwg.mxu0
  %v407 = vand.u32 %v206, 4294901760
  %408 = vmatpush.msra.mxu0 %v407
  %v409 = vand.u32 %v205, 4294901760
  %410 = vmatpush.msra.mxu0 %v409
  %v411 = vand.u32 %v204, 4294901760
  %412 = vmatpush.msra.mxu0 %v411
  %v413 = vand.u32 %v203, 4294901760
  %414 = vmatpush.msra.mxu0 %v413
  %v415 = vand.u32 %v202, 4294901760
  %416 = vmatpush.msra.mxu0 %v415
  %v417 = vand.u32 %v201, 4294901760
  %418 = vmatpush.msra.mxu0 %v417
  %v419 = vand.u32 %v200, 4294901760
  %420 = vmatpush.msra.mxu0 %v419
  %v421 = vand.u32 %v199, 4294901760
  %422 = vmatpush.msra.mxu0 %v421
  %v423 = vand.u32 %v198, 4294901760
  %424 = vmatpush.msra.mxu0 %v423
  %v425 = vand.u32 %v197, 4294901760
  %426 = vmatpush.msra.mxu0 %v425
  %v427 = vand.u32 %v196, 4294901760
  %428 = vmatpush.msra.mxu0 %v427
  %v429 = vand.u32 %v195, 4294901760
  %430 = vmatpush.msra.mxu0 %v429
  %v431 = vand.u32 %v194, 4294901760
  %432 = vmatpush.msra.mxu0 %v431
  %v433 = vand.u32 %v193, 4294901760
  %434 = vmatpush.msra.mxu0 %v433
  %v435 = vand.u32 %v192, 4294901760
  %436 = vmatpush.msra.mxu0 %v435
  %v437 = vand.u32 %v191, 4294901760
  %438 = vmatpush.msra.mxu0 %v437
  %v439 = vand.u32 %v190, 4294901760
  %v440 = vsub.f32 %v190, %v439
  %v441 = vand.u32 %v440, 4294901760
  %442 = vmatmul.f32.gmra.mxu0 %v441
  %v443 = vpop.f32.mrf.mxu0
  %v444 = vadd.f32 %v405, %v443
  %445 = vdwg.mxu0
  %v446 = vand.u32 %v206, 4294901760
  %v447 = vsub.f32 %v206, %v446
  %v448 = vand.u32 %v447, 4294901760
  %449 = vmatpush.msra.mxu0 %v448
  %v450 = vand.u32 %v205, 4294901760
  %v451 = vsub.f32 %v205, %v450
  %v452 = vand.u32 %v451, 4294901760
  %453 = vmatpush.msra.mxu0 %v452
  %v454 = vand.u32 %v204, 4294901760
  %v455 = vsub.f32 %v204, %v454
  %v456 = vand.u32 %v455, 4294901760
  %457 = vmatpush.msra.mxu0 %v456
  %v458 = vand.u32 %v203, 4294901760
  %v459 = vsub.f32 %v203, %v458
  %v460 = vand.u32 %v459, 4294901760
  %461 = vmatpush.msra.mxu0 %v460
  %v462 = vand.u32 %v202, 4294901760
  %v463 = vsub.f32 %v202, %v462
  %v464 = vand.u32 %v463, 4294901760
  %465 = vmatpush.msra.mxu0 %v464
  %v466 = vand.u32 %v201, 4294901760
  %v467 = vsub.f32 %v201, %v466
  %v468 = vand.u32 %v467, 4294901760
  %469 = vmatpush.msra.mxu0 %v468
  %v470 = vand.u32 %v200, 4294901760
  %v471 = vsub.f32 %v200, %v470
  %v472 = vand.u32 %v471, 4294901760
  %473 = vmatpush.msra.mxu0 %v472
  %v474 = vand.u32 %v199, 4294901760
  %v475 = vsub.f32 %v199, %v474
  %v476 = vand.u32 %v475, 4294901760
  %477 = vmatpush.msra.mxu0 %v476
  %v478 = vand.u32 %v198, 4294901760
  %v479 = vsub.f32 %v198, %v478
  %v480 = vand.u32 %v479, 4294901760
  %481 = vmatpush.msra.mxu0 %v480
  %v482 = vand.u32 %v197, 4294901760
  %v483 = vsub.f32 %v197, %v482
  %v484 = vand.u32 %v483, 4294901760
  %485 = vmatpush.msra.mxu0 %v484
  %v486 = vand.u32 %v196, 4294901760
  %v487 = vsub.f32 %v196, %v486
  %v488 = vand.u32 %v487, 4294901760
  %489 = vmatpush.msra.mxu0 %v488
  %v490 = vand.u32 %v195, 4294901760
  %v491 = vsub.f32 %v195, %v490
  %v492 = vand.u32 %v491, 4294901760
  %493 = vmatpush.msra.mxu0 %v492
  %v494 = vand.u32 %v194, 4294901760
  %v495 = vsub.f32 %v194, %v494
  %v496 = vand.u32 %v495, 4294901760
  %497 = vmatpush.msra.mxu0 %v496
  %v498 = vand.u32 %v193, 4294901760
  %v499 = vsub.f32 %v193, %v498
  %v500 = vand.u32 %v499, 4294901760
  %501 = vmatpush.msra.mxu0 %v500
  %v502 = vand.u32 %v192, 4294901760
  %v503 = vsub.f32 %v192, %v502
  %v504 = vand.u32 %v503, 4294901760
  %505 = vmatpush.msra.mxu0 %v504
  %v506 = vand.u32 %v191, 4294901760
  %v507 = vsub.f32 %v191, %v506
  %v508 = vand.u32 %v507, 4294901760
  %509 = vmatpush.msra.mxu0 %v508
  %v510 = vand.u32 %v190, 4294901760
  %511 = vmatmul.f32.gmra.mxu0 %v510
  %v512 = vpop.f32.mrf.mxu0
  %v513 = vadd.f32 %v444, %v512
  %514 = vdwg.mxu0
  %v515 = vand.u32 %v206, 4294901760
  %516 = vmatpush.msra.mxu0 %v515
  %v517 = vand.u32 %v205, 4294901760
  %518 = vmatpush.msra.mxu0 %v517
  %v519 = vand.u32 %v204, 4294901760
  %520 = vmatpush.msra.mxu0 %v519
  %v521 = vand.u32 %v203, 4294901760
  %522 = vmatpush.msra.mxu0 %v521
  %v523 = vand.u32 %v202, 4294901760
  %524 = vmatpush.msra.mxu0 %v523
  %v525 = vand.u32 %v201, 4294901760
  %526 = vmatpush.msra.mxu0 %v525
  %v527 = vand.u32 %v200, 4294901760
  %528 = vmatpush.msra.mxu0 %v527
  %v529 = vand.u32 %v199, 4294901760
  %530 = vmatpush.msra.mxu0 %v529
  %v531 = vand.u32 %v198, 4294901760
  %532 = vmatpush.msra.mxu0 %v531
  %v533 = vand.u32 %v197, 4294901760
  %534 = vmatpush.msra.mxu0 %v533
  %v535 = vand.u32 %v196, 4294901760
  %536 = vmatpush.msra.mxu0 %v535
  %v537 = vand.u32 %v195, 4294901760
  %538 = vmatpush.msra.mxu0 %v537
  %v539 = vand.u32 %v194, 4294901760
  %540 = vmatpush.msra.mxu0 %v539
  %v541 = vand.u32 %v193, 4294901760
  %542 = vmatpush.msra.mxu0 %v541
  %v543 = vand.u32 %v192, 4294901760
  %544 = vmatpush.msra.mxu0 %v543
  %v545 = vand.u32 %v191, 4294901760
  %546 = vmatpush.msra.mxu0 %v545
  %v547 = vand.u32 %v190, 4294901760
  %548 = vmatmul.f32.gmra.mxu0 %v547
  %v549 = vpop.f32.mrf.mxu0
  %v550 = vadd.f32 %v513, %v549
  %551 = vdwg.mxu0
  %v552 = vmax.f32 %v550, 0.0
  %vm553 = vcmask 15360
  %554 = vst.msk [vmem:[%s5] sm:$0xff] %vm553, %v552
  // Predicated region
  $region22: #{tpu_custom_call.1} parent=0 // pred_check
    _
  $region23: #{tpu_custom_call.1} parent=0 // pred_check_branch
    %556 = sbr.rel (0) target = $region25
  $region24: #{tpu_custom_call.1} parent=0 // pred_region
    _
  $region25: #{tpu_custom_call.1} parent=0 // pred_fallthru
    _
  // Predicated region
  $region26: #{tpu_custom_call.1} parent=0 // pred_check
    _
  $region27: #{tpu_custom_call.1} parent=0 // pred_check_branch
    %558 = sbr.rel (0) target = $region29
  $region28: #{tpu_custom_call.1} parent=0 // pred_region
    _
  $region29: #{tpu_custom_call.1} parent=0 // pred_fallthru
    _

</llo_original>
